<compile_context>
chip_gen: v5e
topology: v5e:2x2
jax: 0.10.0
libtpu: 0.0.40
codegen_flags: <defaults>
</compile_context>

<pallas_src>
import jax
import jax.numpy as jnp
from jax.experimental import pallas as pl
from jax.experimental.pallas import tpu as pltpu

LANE = 128          # TPU lane width (last-dim alignment target)
ROW_ALIGN = 16      # bf16 sublane packing: second-minor block dim multiple of 16
MAX_BLOCK_B = 512   # rows per grid step for large batches (~85% HBM roofline measured)


def _round_up(v, m):
    return ((v + m - 1) // m) * m


# ----------------------------------------------------------------------------
# Kernel
# ----------------------------------------------------------------------------
def encoder_kernel(x_ref, w1_ref, b1_ref, w2_ref, b2_ref, w3_ref, b3_ref, o_ref):
    # x streams in bf16 (halves HBM read bytes); do the L1 norm in f32.
    x = x_ref[...].astype(jnp.float32)                      # (block_b, n_in_p)

    # F.normalize(inp, p=1, dim=1): x / max(sum(|x|, dim=1), 1e-12).
    # Zero-padded feature columns don't perturb the norm; zero-padded batch rows
    # give 0 * (1/1e-12) = 0 (no NaN). Reciprocal on the EUP slot is ~free.
    l1 = jnp.sum(jnp.abs(x), axis=-1, keepdims=True)
    inv_l1 = pl.reciprocal(jnp.maximum(l1, 1e-12), approx=True)
    xn = (x * inv_l1).astype(jnp.bfloat16)

    # ---- layer 1: Linear + (Dropout=id) + ReLU ----
    h = jnp.dot(xn, w1_ref[...], preferred_element_type=jnp.float32)
    h = jnp.maximum(h + b1_ref[...], 0.0)

    # ---- layer 2: Linear + (Dropout=id) + ReLU ----
    h = jnp.dot(h.astype(jnp.bfloat16), w2_ref[...], preferred_element_type=jnp.float32)
    h = jnp.maximum(h + b2_ref[...], 0.0)

    # ---- layer 3: Linear (no final activation) ----
    h = jnp.dot(h.astype(jnp.bfloat16), w3_ref[...], preferred_element_type=jnp.float32)
    o_ref[...] = (h + b3_ref[...]).astype(o_ref.dtype)      # bf16 store, 128-lane dense


# ----------------------------------------------------------------------------
# Host-side wrapper
# ----------------------------------------------------------------------------
def encoder_forward(x, pp, n_code, *, max_block_b=MAX_BLOCK_B):
    """x: [B, n_input] f32.  pp: lane-padded params (w* bf16 (in,out), b* f32 (1,out))."""
    B, n_in = x.shape
    n_in_p = pp["w1"].shape[0]
    n_h_p = pp["w2"].shape[0]
    n_code_p = pp["w3"].shape[1]

    # Batch tiling policy:
    #   * pad B only to a 16-row multiple (not 128) -> minimal wasted rows,
    #   * split into >=2 blocks so both v7x TensorCores get a "parallel" step,
    #   * cap the tile at max_block_b rows for large batches.
    B_a = _round_up(B, ROW_ALIGN)
    block_b = min(max_block_b, _round_up(pl.cdiv(B_a, 2), ROW_ALIGN))
    block_b = max(block_b, ROW_ALIGN)
    B_p = _round_up(B_a, block_b)
    grid = (B_p // block_b,)

    # bf16 input stream (halves x HBM bytes); normalization happens in f32 in-kernel.
    x_p = jnp.pad(x.astype(jnp.bfloat16), ((0, B_p - B), (0, n_in_p - n_in)))

    const = lambda shape: pl.BlockSpec(shape, lambda i: (0, 0))  # VMEM-resident params

    # Right-sized VMEM request (double-buffered bf16 x/out streams + resident params
    # + f32 intermediates), with headroom; safe on v5e/v6e (128 MiB) and v7x (64 MiB).
    weight_bytes = sum(int(v.size) * v.dtype.itemsize for v in pp.values())
    stream_bytes = 2 * (block_b * n_in_p * 2) + 2 * (block_b * n_code_p * 2)
    interm_bytes = 4 * block_b * max(n_in_p, n_h_p, n_code_p) * 4
    vmem_limit = max(8 << 20, min(32 << 20,
                                  2 * (stream_bytes + 2 * weight_bytes + interm_bytes)))

    flops = 2 * B_p * (n_in_p * n_h_p + n_h_p * n_h_p + n_h_p * n_code_p)
    bytes_accessed = x_p.size * 2 + weight_bytes + B_p * n_code_p * 2

    out = pl.pallas_call(
        encoder_kernel,
        out_shape=jax.ShapeDtypeStruct((B_p, n_code_p), jnp.bfloat16),
        grid=grid,
        in_specs=[
            pl.BlockSpec((block_b, n_in_p), lambda i: (i, 0)),   # x streams per block
            const(pp["w1"].shape), const(pp["b1"].shape),
            const(pp["w2"].shape), const(pp["b2"].shape),
            const(pp["w3"].shape), const(pp["b3"].shape),
        ],
        out_specs=pl.BlockSpec((block_b, n_code_p), lambda i: (i, 0)),
        compiler_params=pltpu.CompilerParams(
            dimension_semantics=("parallel",),     # megacore / dual-TC sharding
            vmem_limit_bytes=int(vmem_limit),
        ),
        cost_estimate=pl.CostEstimate(flops=flops, transcendentals=B_p,
                                      bytes_accessed=bytes_accessed),
    )(x_p, pp["w1"], pp["b1"], pp["w2"], pp["b2"], pp["w3"], pp["b3"])

    # Upcast outside the kernel; stores inside stay bf16 (half the writeback bytes).
    return out[:B, :n_code].astype(jnp.float32)


# ----------------------------------------------------------------------------
# Parameters
# ----------------------------------------------------------------------------
def init_params(key, n_input, n_hidden, n_code):
    """PyTorch-style Linear init; weights stored pre-transposed as (in, out), f32."""
    ks = jax.random.split(key, 6)

    def lin(kw, kb, fan_in, fan_out):
        bound = 1.0 / jnp.sqrt(fan_in)
        w = jax.random.uniform(kw, (fan_in, fan_out), jnp.float32, -bound, bound)
        b = jax.random.uniform(kb, (1, fan_out), jnp.float32, -bound, bound)
        return w, b

    w1, b1 = lin(ks[0], ks[1], n_input, n_hidden)
    w2, b2 = lin(ks[2], ks[3], n_hidden, n_hidden)
    w3, b3 = lin(ks[4], ks[5], n_hidden, n_code)
    return dict(w1=w1, b1=b1, w2=w2, b2=b2, w3=w3, b3=b3)


def prepare_params(p):
    """Zero-pad all feature dims to the 128-lane width; weights -> bf16 for the MXU."""
    def pad2(a, r, c):
        return jnp.pad(a, ((0, r - a.shape[0]), (0, c - a.shape[1])))

    n_in, n_h = p["w1"].shape
    n_code = p["w3"].shape[1]
    n_in_p, n_h_p, n_code_p = (_round_up(d, LANE) for d in (n_in, n_h, n_code))

    pp = dict(
        w1=pad2(p["w1"], n_in_p, n_h_p).astype(jnp.bfloat16),
        b1=pad2(p["b1"], 1, n_h_p).astype(jnp.float32),
        w2=pad2(p["w2"], n_h_p, n_h_p).astype(jnp.bfloat16),
        b2=pad2(p["b2"], 1, n_h_p).astype(jnp.float32),
        w3=pad2(p["w3"], n_h_p, n_code_p).astype(jnp.bfloat16),
        b3=pad2(p["b3"], 1, n_code_p).astype(jnp.float32),
    )
    return pp, n_code


# ----------------------------------------------------------------------------
# Pure-JAX reference (f32, logical shapes)
# ----------------------------------------------------------------------------
def encoder_reference(x, p):
    l1 = jnp.sum(jnp.abs(x), axis=1, keepdims=True)
    xn = x / jnp.maximum(l1, 1e-12)
    h = jnp.maximum(xn @ p["w1"] + p["b1"], 0.0)
    h = jnp.maximum(h @ p["w2"] + p["b2"], 0.0)
    return h @ p["w3"] + p["b3"]


if __name__ == "__main__":
    # Small, deliberately non-lane-aligned logical sizes; the wrapper pads to 128 lanes
    # and a 16-row batch multiple (224 rows -> 2 parallel grid steps of 112).
    B, n_input, n_hidden, n_code = 200, 96, 64, 32

    key = jax.random.PRNGKey(0)
    k_x, k_p = jax.random.split(key)
    x = jax.random.normal(k_x, (B, n_input), jnp.float32)
    params = init_params(k_p, n_input, n_hidden, n_code)
    padded_params, n_code_out = prepare_params(params)

    out = encoder_forward(x, padded_params, n_code_out)
    out = jax.block_until_ready(out)

    ref = encoder_reference(x, params)
    assert out.shape == (B, n_code), out.shape
    # bf16 input / weights / output on the MXU path with f32 accumulation and an
    # approx (EUP) reciprocal -> relaxed tolerance vs the pure-f32 reference.
    err = float(jnp.max(jnp.abs(out - ref)))
    assert jnp.allclose(out, ref, atol=2e-2, rtol=2e-2), \
        f"mismatch vs reference, max |err|={err}"

    print("KERNEL_OK")
</pallas_src>

<mosaic_0001>
module attributes {stable_mosaic.version = 11 : i64} {
  func.func @encoder_kernel(%arg0: i32, %arg1: memref<112x128xbf16, #tpu.memory_space<vmem>>, %arg2: memref<128x128xbf16, #tpu.memory_space<vmem>>, %arg3: memref<1x128xf32, #tpu.memory_space<vmem>>, %arg4: memref<128x128xbf16, #tpu.memory_space<vmem>>, %arg5: memref<1x128xf32, #tpu.memory_space<vmem>>, %arg6: memref<128x128xbf16, #tpu.memory_space<vmem>>, %arg7: memref<1x128xf32, #tpu.memory_space<vmem>>, %arg8: memref<112x128xbf16, #tpu.memory_space<vmem>>) attributes {dimension_semantics = [#tpu.dimension_semantics<parallel>], iteration_bounds = array<i64: 2>, scalar_prefetch = 0 : i64, scratch_operands = 0 : i64, tpu.core_type = #tpu.core_type<tc>, window_params = [{transform_indices = @transform_0, window_bounds = array<i64: 112, 128>}, {pipeline_mode = #tpu.pipeline_mode<synchronous>, transform_indices = @transform_1, window_bounds = array<i64: 128, 128>}, {pipeline_mode = #tpu.pipeline_mode<synchronous>, transform_indices = @transform_2, window_bounds = array<i64: 1, 128>}, {pipeline_mode = #tpu.pipeline_mode<synchronous>, transform_indices = @transform_3, window_bounds = array<i64: 128, 128>}, {pipeline_mode = #tpu.pipeline_mode<synchronous>, transform_indices = @transform_4, window_bounds = array<i64: 1, 128>}, {pipeline_mode = #tpu.pipeline_mode<synchronous>, transform_indices = @transform_5, window_bounds = array<i64: 128, 128>}, {pipeline_mode = #tpu.pipeline_mode<synchronous>, transform_indices = @transform_6, window_bounds = array<i64: 1, 128>}, {transform_indices = @transform_7, window_bounds = array<i64: 112, 128>}]} {
    %c0 = arith.constant 0 : index
    %c0_0 = arith.constant 0 : index
    %0 = vector.load %arg1[%c0, %c0_0] : memref<112x128xbf16, #tpu.memory_space<vmem>>, vector<112x128xbf16>
    %1 = arith.extf %0 : vector<112x128xbf16> to vector<112x128xf32>
    %2 = math.absf %1 : vector<112x128xf32>
    %cst = arith.constant dense<0.000000e+00> : vector<112xf32>
    %3 = vector.multi_reduction <add>, %2, %cst [1] : vector<112x128xf32> to vector<112xf32>
    %4 = vector.shape_cast %3 : vector<112xf32> to vector<112x1xf32>
    %cst_1 = arith.constant 9.99999996E-13 : f32
    %5 = vector.broadcast %cst_1 : f32 to vector<112x1xf32>
    %6 = arith.maximumf %4, %5 : vector<112x1xf32>
    %7 = tpu.reciprocal %6 {approx = true} : vector<112x1xf32> -> vector<112x1xf32>
    %8 = vector.broadcast %7 : vector<112x1xf32> to vector<112x128xf32>
    %9 = arith.mulf %1, %8 : vector<112x128xf32>
    %10 = arith.truncf %9 : vector<112x128xf32> to vector<112x128xbf16>
    %c0_2 = arith.constant 0 : index
    %c0_3 = arith.constant 0 : index
    %11 = vector.load %arg2[%c0_2, %c0_3] : memref<128x128xbf16, #tpu.memory_space<vmem>>, vector<128x128xbf16>
    %cst_4 = arith.constant dense<0.000000e+00> : vector<112x128xf32>
    %12 = tpu.matmul %10, %11, %cst_4 {dimension_numbers = #tpu.dot_dimension_numbers<[1], [0], [0], [1], [0, 0, 1, 1], [], []>} : vector<112x128xbf16>, vector<128x128xbf16>, vector<112x128xf32> -> vector<112x128xf32>
    %c0_5 = arith.constant 0 : index
    %c0_6 = arith.constant 0 : index
    %13 = vector.load %arg3[%c0_5, %c0_6] : memref<1x128xf32, #tpu.memory_space<vmem>>, vector<1x128xf32>
    %14 = vector.broadcast %13 : vector<1x128xf32> to vector<112x128xf32>
    %15 = arith.addf %12, %14 : vector<112x128xf32>
    %cst_7 = arith.constant 0.000000e+00 : f32
    %16 = vector.broadcast %cst_7 : f32 to vector<112x128xf32>
    %17 = arith.maximumf %15, %16 : vector<112x128xf32>
    %18 = arith.truncf %17 : vector<112x128xf32> to vector<112x128xbf16>
    %c0_8 = arith.constant 0 : index
    %c0_9 = arith.constant 0 : index
    %19 = vector.load %arg4[%c0_8, %c0_9] : memref<128x128xbf16, #tpu.memory_space<vmem>>, vector<128x128xbf16>
    %cst_10 = arith.constant dense<0.000000e+00> : vector<112x128xf32>
    %20 = tpu.matmul %18, %19, %cst_10 {dimension_numbers = #tpu.dot_dimension_numbers<[1], [0], [0], [1], [0, 0, 1, 1], [], []>} : vector<112x128xbf16>, vector<128x128xbf16>, vector<112x128xf32> -> vector<112x128xf32>
    %c0_11 = arith.constant 0 : index
    %c0_12 = arith.constant 0 : index
    %21 = vector.load %arg5[%c0_11, %c0_12] : memref<1x128xf32, #tpu.memory_space<vmem>>, vector<1x128xf32>
    %22 = vector.broadcast %21 : vector<1x128xf32> to vector<112x128xf32>
    %23 = arith.addf %20, %22 : vector<112x128xf32>
    %cst_13 = arith.constant 0.000000e+00 : f32
    %24 = vector.broadcast %cst_13 : f32 to vector<112x128xf32>
    %25 = arith.maximumf %23, %24 : vector<112x128xf32>
    %26 = arith.truncf %25 : vector<112x128xf32> to vector<112x128xbf16>
    %c0_14 = arith.constant 0 : index
    %c0_15 = arith.constant 0 : index
    %27 = vector.load %arg6[%c0_14, %c0_15] : memref<128x128xbf16, #tpu.memory_space<vmem>>, vector<128x128xbf16>
    %cst_16 = arith.constant dense<0.000000e+00> : vector<112x128xf32>
    %28 = tpu.matmul %26, %27, %cst_16 {dimension_numbers = #tpu.dot_dimension_numbers<[1], [0], [0], [1], [0, 0, 1, 1], [], []>} : vector<112x128xbf16>, vector<128x128xbf16>, vector<112x128xf32> -> vector<112x128xf32>
    %c0_17 = arith.constant 0 : index
    %c0_18 = arith.constant 0 : index
    %29 = vector.load %arg7[%c0_17, %c0_18] : memref<1x128xf32, #tpu.memory_space<vmem>>, vector<1x128xf32>
    %30 = vector.broadcast %29 : vector<1x128xf32> to vector<112x128xf32>
    %31 = arith.addf %28, %30 : vector<112x128xf32>
    %32 = arith.truncf %31 : vector<112x128xf32> to vector<112x128xbf16>
    %c0_19 = arith.constant 0 : index
    %c0_20 = arith.constant 0 : index
    %33 = vector.load %arg8[%c0_19, %c0_20] : memref<112x128xbf16, #tpu.memory_space<vmem>>, vector<112x128xbf16>
    tpu.vector_store %arg8[%c0_19, %c0_20], %32 {strides = array<i32>} : memref<112x128xbf16, #tpu.memory_space<vmem>>, vector<112x128xbf16>,
    return
  }
  func.func @transform_0(%arg0: i32) -> (i32, i32) {
    %c0_i32 = arith.constant 0 : i32
    %c0_i32_0 = arith.constant 0 : i32
    return %arg0, %c0_i32 : i32, i32
  }
  func.func @transform_1(%arg0: i32) -> (i32, i32) {
    %c0_i32 = arith.constant 0 : i32
    %c0_i32_0 = arith.constant 0 : i32
    %c0_i32_1 = arith.constant 0 : i32
    return %c0_i32, %c0_i32_0 : i32, i32
  }
  func.func @transform_2(%arg0: i32) -> (i32, i32) {
    %c0_i32 = arith.constant 0 : i32
    %c0_i32_0 = arith.constant 0 : i32
    %c0_i32_1 = arith.constant 0 : i32
    return %c0_i32, %c0_i32_0 : i32, i32
  }
  func.func @transform_3(%arg0: i32) -> (i32, i32) {
    %c0_i32 = arith.constant 0 : i32
    %c0_i32_0 = arith.constant 0 : i32
    %c0_i32_1 = arith.constant 0 : i32
    return %c0_i32, %c0_i32_0 : i32, i32
  }
  func.func @transform_4(%arg0: i32) -> (i32, i32) {
    %c0_i32 = arith.constant 0 : i32
    %c0_i32_0 = arith.constant 0 : i32
    %c0_i32_1 = arith.constant 0 : i32
    return %c0_i32, %c0_i32_0 : i32, i32
  }
  func.func @transform_5(%arg0: i32) -> (i32, i32) {
    %c0_i32 = arith.constant 0 : i32
    %c0_i32_0 = arith.constant 0 : i32
    %c0_i32_1 = arith.constant 0 : i32
    return %c0_i32, %c0_i32_0 : i32, i32
  }
  func.func @transform_6(%arg0: i32) -> (i32, i32) {
    %c0_i32 = arith.constant 0 : i32
    %c0_i32_0 = arith.constant 0 : i32
    %c0_i32_1 = arith.constant 0 : i32
    return %c0_i32, %c0_i32_0 : i32, i32
  }
  func.func @transform_7(%arg0: i32) -> (i32, i32) {
    %c0_i32 = arith.constant 0 : i32
    %c0_i32_0 = arith.constant 0 : i32
    return %arg0, %c0_i32 : i32, i32
  }
}

</mosaic_0001>

<llo_original>
// kernel: tpu_custom_call.1
$region0: #{tpu_custom_call.1}
  #allocation0 [shape = 'u32[]', space=smem, size = 0x4, offset = 0x4, fixed_abs, tag = 'smem constant byte address 0x4 - core index']
  #allocation1 [shape = 'u32[72,128]{1,0:T(1,128)}', space=vmem, size = 0x9000, scoped, tag = 'internal scratch']
  %s0 = inlined_call_operand.hbm [shape: bf16[224,128], index: 0, kind: input, shape index: {}]
  %s1 = inlined_call_operand.hbm [shape: bf16[128,128], index: 1, kind: input, shape index: {}]
  %s2 = inlined_call_operand.vmem [shape: f32[1,128], index: 2, kind: input, shape index: {}]
  %s3 = inlined_call_operand.hbm [shape: bf16[128,128], index: 3, kind: input, shape index: {}]
  %s4 = inlined_call_operand.vmem [shape: f32[1,128], index: 4, kind: input, shape index: {}]
  %s5 = inlined_call_operand.hbm [shape: bf16[128,128], index: 5, kind: input, shape index: {}]
  %s6 = inlined_call_operand.vmem [shape: f32[1,128], index: 6, kind: input, shape index: {}]
  %s7 = inlined_call_operand.hbm [shape: bf16[224,128], index: 7, kind: output, shape index: {}]
  %s8 = sld [smem:[#allocation0]]
  $region77: #{tpu_custom_call.1} parent=0
    _
  %s10 = ssub.s32 1, %s8
  %s11 = scalar_select 0, %s10, %s8
  $region1: #{tpu_custom_call.1} parent=0
    #allocation2 [shape = 'u8[57344]{0}', space=vmem, size = 0xe000, scoped, tag = 'input window, operand 0']
    #allocation3 [shape = 's32[2]{0}', space=sflag, size = 0x8, scoped, tag = 'scoped memory for tpu_custom_call.1']
    #allocation4 [shape = 's32[2]{0}', space=sflag, size = 0x8, scoped, tag = 'scoped memory for tpu_custom_call.1']
    #allocation5 [shape = 'u8[32768]{0}', space=vmem, size = 0x8000, scoped, tag = 'input window, operand 1, single buffered']
    #allocation6 [shape = 's32[1]{0}', space=sflag, size = 0x4, scoped, tag = 'scoped memory for tpu_custom_call.1']
    #allocation7 [shape = 'u8[32768]{0}', space=vmem, size = 0x8000, scoped, tag = 'input window, operand 3, single buffered']
    #allocation8 [shape = 'u8[32768]{0}', space=vmem, size = 0x8000, scoped, tag = 'input window, operand 5, single buffered']
    #allocation9 [shape = 's32[1]{0}', space=sflag, size = 0x4, scoped, tag = 'scoped memory for tpu_custom_call.1']
    #allocation10 [shape = 'u8[57344]{0}', space=vmem, size = 0xe000, scoped, tag = 'output window, operand 0']
    %12 = vsyncpa [#allocation3], 0
    %s13 = scalar_lea.sflag [#allocation3], 1
    %14 = vsyncpa %s13, 0
    %15 = vsyncpa [#allocation6], 0
    %16 = vsyncpa [#allocation9], 0
    %17 = vsyncpa [#allocation4], 0
    %s18 = scalar_lea.sflag [#allocation4], 1
    %19 = vsyncpa %s18, 0
    loop: start=0, step=1, limit=4
    $region2: #{tpu_custom_call.1} parent=1 // loop_pre_header
      _
    $region3: #{tpu_custom_call.1} parent=1 // loop_header
      %s21 = sphi 0, %s25
      %p22 = scmp.ge.s32.totalorder %s21, 4
      %s31 = sphi 0, %s33
      %s34 = sphi 0, %s31
      %s35 = sphi 0, %s34
      %s51 = sphi 0, %s35
      %s55 = sphi 0, %s55
      %s57 = sphi 0, %s55
      %s58 = sphi 0, %s57
      %s72 = sphi 0, %s58
      %s76 = sphi 0, %s76
      %s78 = sphi 0, %s76
      %s79 = sphi 0, %s78
      %s93 = sphi 0, %s79
      %s97 = sphi 0, %s97
      %s99 = sphi 0, %s97
      %s100 = sphi 0, %s99
      %s114 = sphi 0, %s100
      %s118 = sphi 0, %s118
      %s120 = sphi 0, %s118
      %s121 = sphi 0, %s120
      %s135 = sphi 0, %s121
      %s139 = sphi 0, %s139
      %s141 = sphi 0, %s139
      %s142 = sphi 0, %s141
      %s156 = sphi 0, %s142
      %s160 = sphi 0, %s160
      %s162 = sphi 0, %s160
      %s163 = sphi 0, %s162
      %s177 = sphi 0, %s163
      %s183 = sphi 0, %s185
      %s186 = sphi 0, %s183
      %s187 = sphi 0, %s186
      %s203 = sphi 0, %s187
    $region4: #{tpu_custom_call.1} parent=1 // loop_header_branch
      %24 = sbr.rel (%p22) target = $region8
    $region5: #{tpu_custom_call.1} parent=1 // loop_body
      %s26 = ssub.s32 %s21, 1
      %s27 = ssub.s32 %s21, 2
      %s28 = sadd.s32 %s21, 1
      %s29 = ssub.s32 %s21, %s28
      %p30 = scmp.eq.s32.totalorder %s29, 0
      %s32 = sadd.s32 %s31, 1
      %s33 = scalar_select %p30, %s31, %s32
      %p36 = pneg %p30
      %p37 = scmp.eq.s32.totalorder %s21, 1
      %p38 = por %p36, %p37
      %p39 = scmp.ne.s32.totalorder %s31, %s34
      %p40 = scmp.eq.s32.totalorder %s21, 0
      %p41 = por %p39, %p40
      %p42 = scmp.ne.s32.totalorder %s31, %s34
      %p43 = scmp.eq.s32.totalorder %s26, 1
      %p44 = por %p42, %p43
      %p45 = scmp.ne.s32.totalorder %s34, %s35
      %p46 = scmp.eq.s32.totalorder %s26, 0
      %p47 = por %p45, %p46
      %p48 = scmp.ne.s32.totalorder %s34, %s35
      %p49 = scmp.eq.s32.totalorder %s27, 1
      %p50 = por %p48, %p49
      %p52 = scmp.ne.s32.totalorder %s35, %s51
      %p53 = scmp.eq.s32.totalorder %s27, 0
      %p54 = por %p52, %p53
      %s56 = sadd.s32 %s55, 1
      %p59 = scmp.eq.s32.totalorder %s21, 1
      %p60 = scmp.ne.s32.totalorder %s55, %s57
      %p61 = scmp.eq.s32.totalorder %s21, 0
      %p62 = por %p60, %p61
      %p63 = scmp.ne.s32.totalorder %s55, %s57
      %p64 = scmp.eq.s32.totalorder %s26, 1
      %p65 = por %p63, %p64
      %p66 = scmp.ne.s32.totalorder %s57, %s58
      %p67 = scmp.eq.s32.totalorder %s26, 0
      %p68 = por %p66, %p67
      %p69 = scmp.ne.s32.totalorder %s57, %s58
      %p70 = scmp.eq.s32.totalorder %s27, 1
      %p71 = por %p69, %p70
      %p73 = scmp.ne.s32.totalorder %s58, %s72
      %p74 = scmp.eq.s32.totalorder %s27, 0
      %p75 = por %p73, %p74
      %s77 = sadd.s32 %s76, 1
      %p80 = scmp.eq.s32.totalorder %s21, 1
      %p81 = scmp.ne.s32.totalorder %s76, %s78
      %p82 = scmp.eq.s32.totalorder %s21, 0
      %p83 = por %p81, %p82
      %p84 = scmp.ne.s32.totalorder %s76, %s78
      %p85 = scmp.eq.s32.totalorder %s26, 1
      %p86 = por %p84, %p85
      %p87 = scmp.ne.s32.totalorder %s78, %s79
      %p88 = scmp.eq.s32.totalorder %s26, 0
      %p89 = por %p87, %p88
      %p90 = scmp.ne.s32.totalorder %s78, %s79
      %p91 = scmp.eq.s32.totalorder %s27, 1
      %p92 = por %p90, %p91
      %p94 = scmp.ne.s32.totalorder %s79, %s93
      %p95 = scmp.eq.s32.totalorder %s27, 0
      %p96 = por %p94, %p95
      %s98 = sadd.s32 %s97, 1
      %p101 = scmp.eq.s32.totalorder %s21, 1
      %p102 = scmp.ne.s32.totalorder %s97, %s99
      %p103 = scmp.eq.s32.totalorder %s21, 0
      %p104 = por %p102, %p103
      %p105 = scmp.ne.s32.totalorder %s97, %s99
      %p106 = scmp.eq.s32.totalorder %s26, 1
      %p107 = por %p105, %p106
      %p108 = scmp.ne.s32.totalorder %s99, %s100
      %p109 = scmp.eq.s32.totalorder %s26, 0
      %p110 = por %p108, %p109
      %p111 = scmp.ne.s32.totalorder %s99, %s100
      %p112 = scmp.eq.s32.totalorder %s27, 1
      %p113 = por %p111, %p112
      %p115 = scmp.ne.s32.totalorder %s100, %s114
      %p116 = scmp.eq.s32.totalorder %s27, 0
      %p117 = por %p115, %p116
      %s119 = sadd.s32 %s118, 1
      %p122 = scmp.eq.s32.totalorder %s21, 1
      %p123 = scmp.ne.s32.totalorder %s118, %s120
      %p124 = scmp.eq.s32.totalorder %s21, 0
      %p125 = por %p123, %p124
      %p126 = scmp.ne.s32.totalorder %s118, %s120
      %p127 = scmp.eq.s32.totalorder %s26, 1
      %p128 = por %p126, %p127
      %p129 = scmp.ne.s32.totalorder %s120, %s121
      %p130 = scmp.eq.s32.totalorder %s26, 0
      %p131 = por %p129, %p130
      %p132 = scmp.ne.s32.totalorder %s120, %s121
      %p133 = scmp.eq.s32.totalorder %s27, 1
      %p134 = por %p132, %p133
      %p136 = scmp.ne.s32.totalorder %s121, %s135
      %p137 = scmp.eq.s32.totalorder %s27, 0
      %p138 = por %p136, %p137
      %s140 = sadd.s32 %s139, 1
      %p143 = scmp.eq.s32.totalorder %s21, 1
      %p144 = scmp.ne.s32.totalorder %s139, %s141
      %p145 = scmp.eq.s32.totalorder %s21, 0
      %p146 = por %p144, %p145
      %p147 = scmp.ne.s32.totalorder %s139, %s141
      %p148 = scmp.eq.s32.totalorder %s26, 1
      %p149 = por %p147, %p148
      %p150 = scmp.ne.s32.totalorder %s141, %s142
      %p151 = scmp.eq.s32.totalorder %s26, 0
      %p152 = por %p150, %p151
      %p153 = scmp.ne.s32.totalorder %s141, %s142
      %p154 = scmp.eq.s32.totalorder %s27, 1
      %p155 = por %p153, %p154
      %p157 = scmp.ne.s32.totalorder %s142, %s156
      %p158 = scmp.eq.s32.totalorder %s27, 0
      %p159 = por %p157, %p158
      %s161 = sadd.s32 %s160, 1
      %p164 = scmp.eq.s32.totalorder %s21, 1
      %p165 = scmp.ne.s32.totalorder %s160, %s162
      %p166 = scmp.eq.s32.totalorder %s21, 0
      %p167 = por %p165, %p166
      %p168 = scmp.ne.s32.totalorder %s160, %s162
      %p169 = scmp.eq.s32.totalorder %s26, 1
      %p170 = por %p168, %p169
      %p171 = scmp.ne.s32.totalorder %s162, %s163
      %p172 = scmp.eq.s32.totalorder %s26, 0
      %p173 = por %p171, %p172
      %p174 = scmp.ne.s32.totalorder %s162, %s163
      %p175 = scmp.eq.s32.totalorder %s27, 1
      %p176 = por %p174, %p175
      %p178 = scmp.ne.s32.totalorder %s163, %s177
      %p179 = scmp.eq.s32.totalorder %s27, 0
      %p180 = por %p178, %p179
      %s181 = ssub.s32 %s21, %s28
      %p182 = scmp.eq.s32.totalorder %s181, 0
      %s184 = sadd.s32 %s183, 1
      %s185 = scalar_select %p182, %s183, %s184
      %p188 = pneg %p182
      %p189 = scmp.eq.s32.totalorder %s21, 1
      %p190 = por %p188, %p189
      %p191 = scmp.ne.s32.totalorder %s183, %s186
      %p192 = scmp.eq.s32.totalorder %s21, 0
      %p193 = por %p191, %p192
      %p194 = scmp.ne.s32.totalorder %s183, %s186
      %p195 = scmp.eq.s32.totalorder %s26, 1
      %p196 = por %p194, %p195
      %p197 = scmp.ne.s32.totalorder %s186, %s187
      %p198 = scmp.eq.s32.totalorder %s26, 0
      %p199 = por %p197, %p198
      %p200 = scmp.ne.s32.totalorder %s186, %s187
      %p201 = scmp.eq.s32.totalorder %s27, 1
      %p202 = por %p200, %p201
      %p204 = scmp.ne.s32.totalorder %s187, %s203
      %p205 = scmp.eq.s32.totalorder %s27, 0
      %p206 = por %p204, %p205
      %p207 = scmp.le.s32.totalorder 1, %s21
      %p208 = scmp.lt.s32.totalorder %s21, 3
      %p209 = pnand %p207, %p208
      %p210 = pneg %p209
      // Predicated region
      $region9: #{tpu_custom_call.1} parent=5 // pred_check
        _
      $region10: #{tpu_custom_call.1} parent=5 // pred_check_branch
        %212 = sbr.rel (%p209) target = $region12
      $region11: #{tpu_custom_call.1} parent=5 // pred_region
        %s213 = ssub.s32 %s21, 1
        // Predicated region
        $region13: #{tpu_custom_call.1} parent=11 // pred_check
          %p214 = pneg %p68
        $region14: #{tpu_custom_call.1} parent=11 // pred_check_branch
          %216 = sbr.rel (%p214) target = $region16
        $region15: #{tpu_custom_call.1} parent=11 // pred_region
          %218 = vsyncadd [#allocation6], 0
          %s219 = sshll.u32 %s1, 4
          %s220 = int_to_ptr.hbm [resolvable:$true] %s219
          %s221 = sshll.u32 [#allocation5], 4
          %s222 = int_to_ptr.vmem [resolvable:$true] %s221
          %227 = dma.hbm_to_vmem [thread:$0]  %s220, 1024, %s222, [#allocation6], 64, 64, 4
        $region16: #{tpu_custom_call.1} parent=11 // pred_fallthru
          _
        // Predicated region
        $region17: #{tpu_custom_call.1} parent=11 // pred_check
          %p228 = pneg %p89
        $region18: #{tpu_custom_call.1} parent=11 // pred_check_branch
          %230 = sbr.rel (%p228) target = $region20
        $region19: #{tpu_custom_call.1} parent=11 // pred_region
          _
        $region20: #{tpu_custom_call.1} parent=11 // pred_fallthru
          _
        // Predicated region
        $region21: #{tpu_custom_call.1} parent=11 // pred_check
          %p231 = pneg %p110
        $region22: #{tpu_custom_call.1} parent=11 // pred_check_branch
          %233 = sbr.rel (%p231) target = $region24
        $region23: #{tpu_custom_call.1} parent=11 // pred_region
          %235 = vsyncadd [#allocation6], 0
          %s236 = sshll.u32 %s3, 4
          %s237 = int_to_ptr.hbm [resolvable:$true] %s236
          %s238 = sshll.u32 [#allocation7], 4
          %s239 = int_to_ptr.vmem [resolvable:$true] %s238
          %244 = dma.hbm_to_vmem [thread:$0]  %s237, 1024, %s239, [#allocation6], 64, 64, 4
        $region24: #{tpu_custom_call.1} parent=11 // pred_fallthru
          _
        // Predicated region
        $region25: #{tpu_custom_call.1} parent=11 // pred_check
          %p245 = pneg %p131
        $region26: #{tpu_custom_call.1} parent=11 // pred_check_branch
          %247 = sbr.rel (%p245) target = $region28
        $region27: #{tpu_custom_call.1} parent=11 // pred_region
          _
        $region28: #{tpu_custom_call.1} parent=11 // pred_fallthru
          _
        // Predicated region
        $region29: #{tpu_custom_call.1} parent=11 // pred_check
          %p248 = pneg %p152
        $region30: #{tpu_custom_call.1} parent=11 // pred_check_branch
          %250 = sbr.rel (%p248) target = $region32
        $region31: #{tpu_custom_call.1} parent=11 // pred_region
          %252 = vsyncadd [#allocation9], 0
          %s253 = sshll.u32 %s5, 4
          %s254 = int_to_ptr.hbm [resolvable:$true] %s253
          %s255 = sshll.u32 [#allocation8], 4
          %s256 = int_to_ptr.vmem [resolvable:$true] %s255
          %261 = dma.hbm_to_vmem [thread:$0]  %s254, 1024, %s256, [#allocation9], 64, 64, 4
        $region32: #{tpu_custom_call.1} parent=11 // pred_fallthru
          _
        // Predicated region
        $region33: #{tpu_custom_call.1} parent=11 // pred_check
          %p262 = pneg %p173
        $region34: #{tpu_custom_call.1} parent=11 // pred_check_branch
          %264 = sbr.rel (%p262) target = $region36
        $region35: #{tpu_custom_call.1} parent=11 // pred_region
          _
        $region36: #{tpu_custom_call.1} parent=11 // pred_fallthru
          _
      $region12: #{tpu_custom_call.1} parent=5 // pred_fallthru
        _
      %p265 = scmp.lt.s32.totalorder %s21, 2
      // Predicated region
      $region37: #{tpu_custom_call.1} parent=5 // pred_check
        %p266 = pneg %p265
      $region38: #{tpu_custom_call.1} parent=5 // pred_check_branch
        %268 = sbr.rel (%p266) target = $region40
      $region39: #{tpu_custom_call.1} parent=5 // pred_region
        // Predicated region
        $region41: #{tpu_custom_call.1} parent=39 // pred_check
          %p269 = pneg %p41
        $region42: #{tpu_custom_call.1} parent=39 // pred_check_branch
          %271 = sbr.rel (%p269) target = $region44
        $region43: #{tpu_custom_call.1} parent=39 // pred_region
          %s272 = sand.u32 %s31, 1
          %s273 = scalar_lea.sflag [#allocation3], %s272
          %s274 = sand.u32 %s31, 1
          %s275 = smul.addr %s274, 56
          %s276 = scalar_lea.vmem [#allocation2], %s275
          %s277 = smul.u32 14, %s21
          %279 = vsyncadd %s273, 0
          %s280 = smul.addr %s277, 4
          %s281 = scalar_lea.hbm %s0, %s280
          %s282 = sshll.u32 %s281, 4
          %s283 = int_to_ptr.hbm [resolvable:$true] %s282
          %s284 = sshll.u32 %s276, 4
          %s285 = int_to_ptr.vmem [resolvable:$true] %s284
          %290 = dma.hbm_to_vmem [thread:$0]  %s283, 896, %s285, %s273, 64, 64, 4
        $region44: #{tpu_custom_call.1} parent=39 // pred_fallthru
          _
      $region40: #{tpu_custom_call.1} parent=5 // pred_fallthru
        _
      %p291 = scmp.le.s32.totalorder 1, %s21
      %p292 = scmp.lt.s32.totalorder %s21, 3
      %p293 = pnand %p291, %p292
      %p294 = pneg %p293
      // Predicated region
      $region45: #{tpu_custom_call.1} parent=5 // pred_check
        _
      $region46: #{tpu_custom_call.1} parent=5 // pred_check_branch
        %296 = sbr.rel (%p293) target = $region48
      $region47: #{tpu_custom_call.1} parent=5 // pred_region
        %s297 = ssub.s32 %s21, 1
        %s298 = sand.u32 %s34, 1
        %s299 = scalar_lea.sflag [#allocation3], %s298
        %s300 = sand.u32 %s34, 1
        %s301 = smul.addr %s300, 56
        %s302 = scalar_lea.vmem [#allocation2], %s301
        // Predicated region
        $region49: #{tpu_custom_call.1} parent=47 // pred_check
          %p303 = pneg %p47
        $region50: #{tpu_custom_call.1} parent=47 // pred_check_branch
          %305 = sbr.rel (%p303) target = $region52
        $region51: #{tpu_custom_call.1} parent=47 // pred_region
          %307 = dma.done %s299, 896
        $region52: #{tpu_custom_call.1} parent=47 // pred_fallthru
          _
        // Predicated region
        $region53: #{tpu_custom_call.1} parent=47 // pred_check
          %p308 = pneg %p68
        $region54: #{tpu_custom_call.1} parent=47 // pred_check_branch
          %310 = sbr.rel (%p308) target = $region56
        $region55: #{tpu_custom_call.1} parent=47 // pred_region
          %312 = dma.done [#allocation6], 1024
        $region56: #{tpu_custom_call.1} parent=47 // pred_fallthru
          _
        // Predicated region
        $region57: #{tpu_custom_call.1} parent=47 // pred_check
          %p313 = pneg %p110
        $region58: #{tpu_custom_call.1} parent=47 // pred_check_branch
          %315 = sbr.rel (%p313) target = $region60
        $region59: #{tpu_custom_call.1} parent=47 // pred_region
          %317 = dma.done [#allocation6], 1024
        $region60: #{tpu_custom_call.1} parent=47 // pred_fallthru
          _
        // Predicated region
        $region61: #{tpu_custom_call.1} parent=47 // pred_check
          %p318 = pneg %p152
        $region62: #{tpu_custom_call.1} parent=47 // pred_check_branch
          %320 = sbr.rel (%p318) target = $region64
        $region63: #{tpu_custom_call.1} parent=47 // pred_region
          %322 = dma.done [#allocation9], 1024
        $region64: #{tpu_custom_call.1} parent=47 // pred_fallthru
          _
        %s323 = sand.u32 %s34, 1
        %s324 = scalar_lea.sflag [#allocation3], %s323
        %s325 = sand.u32 %s34, 1
        %s326 = smul.addr %s325, 56
        %s327 = scalar_lea.vmem [#allocation2], %s326
        %p328 = pneg %p47
        %p329 = pneg %p44
        %p330 = pneg %p68
        %p331 = pneg %p65
        %p332 = pneg %p89
        %p333 = pneg %p86
        %p334 = pneg %p110
        %p335 = pneg %p107
        %p336 = pneg %p131
        %p337 = pneg %p128
        %p338 = pneg %p152
        %p339 = pneg %p149
        %p340 = pneg %p173
        %p341 = pneg %p170
        %p342 = pneg %p199
        %p343 = pneg %p196
        %s344 = sand.u32 %s186, 1
        %s345 = scalar_lea.sflag [#allocation4], %s344
        %s346 = sand.u32 %s186, 1
        %s347 = smul.addr %s346, 56
        %s348 = scalar_lea.vmem [#allocation10], %s347
        %s349 = smul.u32 14, %s26
        %s350 = smul.u32 14, %s26
        %v351 = vld [vmem:[%s302] sm:$0xf]
        %v352 = vld [vmem:[%s302 + $0x4] sm:$0xf]
        %v353 = vld [vmem:[%s302 + $0x8] sm:$0xf]
        %v354 = vld [vmem:[%s302 + $0xc] sm:$0xf]
        %v355 = vld [vmem:[%s302 + $0x10] sm:$0xf]
        %v356 = vld [vmem:[%s302 + $0x14] sm:$0xf]
        %v357 = vld [vmem:[%s302 + $0x18] sm:$0xf]
        %v358 = vld [vmem:[%s302 + $0x1c] sm:$0xf]
        %v359 = vld [vmem:[%s302 + $0x20] sm:$0xf]
        %v360 = vld [vmem:[%s302 + $0x24] sm:$0xf]
        %v361 = vld [vmem:[%s302 + $0x28] sm:$0xf]
        %v362 = vld [vmem:[%s302 + $0x2c] sm:$0xf]
        %v363 = vld [vmem:[%s302 + $0x30] sm:$0xf]
        %v364 = vld [vmem:[%s302 + $0x34] sm:$0xf]
        %v365 = vunpack.c.l.bf16 %v351
        %v366 = vunpack.c.l.bf16 %v352
        %v367 = vunpack.c.l.bf16 %v353
        %v368 = vunpack.c.l.bf16 %v354
        %v369 = vunpack.c.l.bf16 %v355
        %v370 = vunpack.c.l.bf16 %v356
        %v371 = vunpack.c.l.bf16 %v357
        %v372 = vunpack.c.l.bf16 %v358
        %v373 = vunpack.c.l.bf16 %v359
        %v374 = vunpack.c.l.bf16 %v360
        %v375 = vunpack.c.l.bf16 %v361
        %v376 = vunpack.c.l.bf16 %v362
        %v377 = vunpack.c.l.bf16 %v363
        %v378 = vunpack.c.l.bf16 %v364
        %v379 = vand.u32 2147483647, %v365
        %v380 = vand.u32 2147483647, %v366
        %v381 = vand.u32 2147483647, %v367
        %v382 = vand.u32 2147483647, %v368
        %v383 = vand.u32 2147483647, %v369
        %v384 = vand.u32 2147483647, %v370
        %v385 = vand.u32 2147483647, %v371
        %v386 = vand.u32 2147483647, %v372
        %v387 = vand.u32 2147483647, %v373
        %v388 = vand.u32 2147483647, %v374
        %v389 = vand.u32 2147483647, %v375
        %v390 = vand.u32 2147483647, %v376
        %v391 = vand.u32 2147483647, %v377
        %v392 = vand.u32 2147483647, %v378
        %393 = vadd.xlane.f32.xlu0 %v379
        %v394 = vpop.xlane.xlu0 %393
        %395 = vadd.xlane.f32.xlu0 %v380
        %v396 = vpop.xlane.xlu0 %395
        %397 = vadd.xlane.f32.xlu0 %v381
        %v398 = vpop.xlane.xlu0 %397
        %399 = vadd.xlane.f32.xlu0 %v382
        %v400 = vpop.xlane.xlu0 %399
        %401 = vadd.xlane.f32.xlu0 %v383
        %v402 = vpop.xlane.xlu0 %401
        %403 = vadd.xlane.f32.xlu0 %v384
        %v404 = vpop.xlane.xlu0 %403
        %405 = vadd.xlane.f32.xlu0 %v385
        %v406 = vpop.xlane.xlu0 %405
        %407 = vadd.xlane.f32.xlu0 %v386
        %v408 = vpop.xlane.xlu0 %407
        %409 = vadd.xlane.f32.xlu0 %v387
        %v410 = vpop.xlane.xlu0 %409
        %411 = vadd.xlane.f32.xlu0 %v388
        %v412 = vpop.xlane.xlu0 %411
        %413 = vadd.xlane.f32.xlu0 %v389
        %v414 = vpop.xlane.xlu0 %413
        %415 = vadd.xlane.f32.xlu0 %v390
        %v416 = vpop.xlane.xlu0 %415
        %417 = vadd.xlane.f32.xlu0 %v391
        %v418 = vpop.xlane.xlu0 %417
        %419 = vadd.xlane.f32.xlu0 %v392
        %v420 = vpop.xlane.xlu0 %419
        %v421 = vmax.f32 %v394, 1e-12
        %v422 = vmax.f32 %v396, 1e-12
        %v423 = vmax.f32 %v398, 1e-12
        %v424 = vmax.f32 %v400, 1e-12
        %v425 = vmax.f32 %v402, 1e-12
        %v426 = vmax.f32 %v404, 1e-12
        %v427 = vmax.f32 %v406, 1e-12
        %v428 = vmax.f32 %v408, 1e-12
        %v429 = vmax.f32 %v410, 1e-12
        %v430 = vmax.f32 %v412, 1e-12
        %v431 = vmax.f32 %v414, 1e-12
        %v432 = vmax.f32 %v416, 1e-12
        %v433 = vmax.f32 %v418, 1e-12
        %v434 = vmax.f32 %v420, 1e-12
        %v435 = vrcp.pop %v421
        %v436 = vrcp.pop %v422
        %v437 = vrcp.pop %v423
        %v438 = vrcp.pop %v424
        %v439 = vrcp.pop %v425
        %v440 = vrcp.pop %v426
        %v441 = vrcp.pop %v427
        %v442 = vrcp.pop %v428
        %v443 = vrcp.pop %v429
        %v444 = vrcp.pop %v430
        %v445 = vrcp.pop %v431
        %v446 = vrcp.pop %v432
        %v447 = vrcp.pop %v433
        %v448 = vrcp.pop %v434
        %v449 = vmul.f32 %v365, %v435
        %v450 = vmul.f32 %v366, %v436
        %v451 = vmul.f32 %v367, %v437
        %v452 = vmul.f32 %v368, %v438
        %v453 = vmul.f32 %v369, %v439
        %v454 = vmul.f32 %v370, %v440
        %v455 = vmul.f32 %v371, %v441
        %v456 = vmul.f32 %v372, %v442
        %v457 = vmul.f32 %v373, %v443
        %v458 = vmul.f32 %v374, %v444
        %v459 = vmul.f32 %v375, %v445
        %v460 = vmul.f32 %v376, %v446
        %v461 = vmul.f32 %v377, %v447
        %v462 = vmul.f32 %v378, %v448
        %v463 = vpack.c.bf16 %v450, %v449
        %v464 = vpack.c.bf16 %v452, %v451
        %v465 = vpack.c.bf16 %v454, %v453
        %v466 = vpack.c.bf16 %v456, %v455
        %v467 = vpack.c.bf16 %v458, %v457
        %v468 = vpack.c.bf16 %v460, %v459
        %v469 = vpack.c.bf16 %v462, %v461
        %v470 = vld [vmem:[#allocation5] sm:$0xf]
        %v471 = vld [vmem:[#allocation5 + $0x4] sm:$0xf]
        %v472 = vld [vmem:[#allocation5 + $0x8] sm:$0xf]
        %v473 = vld [vmem:[#allocation5 + $0xc] sm:$0xf]
        %v474 = vld [vmem:[#allocation5 + $0x10] sm:$0xf]
        %v475 = vld [vmem:[#allocation5 + $0x14] sm:$0xf]
        %v476 = vld [vmem:[#allocation5 + $0x18] sm:$0xf]
        %v477 = vld [vmem:[#allocation5 + $0x1c] sm:$0xf]
        %v478 = vld [vmem:[#allocation5 + $0x20] sm:$0xf]
        %v479 = vld [vmem:[#allocation5 + $0x24] sm:$0xf]
        %v480 = vld [vmem:[#allocation5 + $0x28] sm:$0xf]
        %v481 = vld [vmem:[#allocation5 + $0x2c] sm:$0xf]
        %v482 = vld [vmem:[#allocation5 + $0x30] sm:$0xf]
        %v483 = vld [vmem:[#allocation5 + $0x34] sm:$0xf]
        %v484 = vld [vmem:[#allocation5 + $0x38] sm:$0xf]
        %v485 = vld [vmem:[#allocation5 + $0x3c] sm:$0xf]
        %v486 = vld [vmem:[%s2] sm:$0x1]
        %v488 = vperm.slane %v486, 0
        %v506 = vunpack.c.l.b16 %v470
        %v507 = vunpack.c.l.b16 %v471
        %v508 = vunpack.c.l.b16 %v472
        %v509 = vunpack.c.l.b16 %v473
        %v510 = vunpack.c.l.b16 %v474
        %v511 = vunpack.c.l.b16 %v475
        %v512 = vunpack.c.l.b16 %v476
        %v513 = vunpack.c.l.b16 %v477
        %v514 = vunpack.c.l.b16 %v478
        %v515 = vunpack.c.l.b16 %v479
        %v516 = vunpack.c.l.b16 %v480
        %v517 = vunpack.c.l.b16 %v481
        %v518 = vunpack.c.l.b16 %v482
        %v519 = vunpack.c.l.b16 %v483
        %v520 = vunpack.c.l.b16 %v484
        %v521 = vunpack.c.l.b16 %v485
        %v522 = vpack.c.b16 %v507, %v506
        %v523 = vpack.c.b16 %v509, %v508
        %v524 = vpack.c.b16 %v511, %v510
        %v525 = vpack.c.b16 %v513, %v512
        %v526 = vpack.c.b16 %v515, %v514
        %v527 = vpack.c.b16 %v517, %v516
        %v528 = vpack.c.b16 %v519, %v518
        %v529 = vpack.c.b16 %v521, %v520
        %538 = vmatpush.bf16.msra.mxu0 %v529
        %539 = vmatpush.bf16.msra.mxu0 %v528
        %540 = vmatpush.bf16.msra.mxu0 %v527
        %541 = vmatpush.bf16.msra.mxu0 %v526
        %542 = vmatpush.bf16.msra.mxu0 %v525
        %543 = vmatpush.bf16.msra.mxu0 %v524
        %544 = vmatpush.bf16.msra.mxu0 %v523
        %545 = vmatpush.bf16.msra.mxu0 %v522
        %546 = vmatmul.bf16.gmra.mxu0 %v463
        %v547 = vpop.f32.mrf.mxu0
        %v548 = vadd.f32 %v488, %v547
        %v549 = vpop.f32.mrf.mxu0
        %v550 = vadd.f32 %v488, %v549
        %551 = vmatmul.bf16.gmra.mxu0 %v464
        %v552 = vpop.f32.mrf.mxu0
        %v553 = vadd.f32 %v488, %v552
        %v554 = vpop.f32.mrf.mxu0
        %v555 = vadd.f32 %v488, %v554
        %556 = vmatmul.bf16.gmra.mxu0 %v465
        %v557 = vpop.f32.mrf.mxu0
        %v558 = vadd.f32 %v488, %v557
        %v559 = vpop.f32.mrf.mxu0
        %v560 = vadd.f32 %v488, %v559
        %561 = vmatmul.bf16.gmra.mxu0 %v466
        %v562 = vpop.f32.mrf.mxu0
        %v563 = vadd.f32 %v488, %v562
        %v564 = vpop.f32.mrf.mxu0
        %v565 = vadd.f32 %v488, %v564
        %566 = vmatmul.bf16.gmra.mxu0 %v467
        %v567 = vpop.f32.mrf.mxu0
        %v568 = vadd.f32 %v488, %v567
        %v569 = vpop.f32.mrf.mxu0
        %v570 = vadd.f32 %v488, %v569
        %571 = vmatmul.bf16.gmra.mxu0 %v468
        %v572 = vpop.f32.mrf.mxu0
        %v573 = vadd.f32 %v488, %v572
        %v574 = vpop.f32.mrf.mxu0
        %v575 = vadd.f32 %v488, %v574
        %576 = vmatmul.bf16.gmra.mxu0 %v469
        %v577 = vpop.f32.mrf.mxu0
        %v578 = vadd.f32 %v488, %v577
        %v579 = vpop.f32.mrf.mxu0
        %v580 = vadd.f32 %v488, %v579
        %581 = vdwg.mxu0
        %v582 = vmax.f32 %v548, 0.0
        %v583 = vmax.f32 %v550, 0.0
        %v584 = vmax.f32 %v553, 0.0
        %v585 = vmax.f32 %v555, 0.0
        %v586 = vmax.f32 %v558, 0.0
        %v587 = vmax.f32 %v560, 0.0
        %v588 = vmax.f32 %v563, 0.0
        %v589 = vmax.f32 %v565, 0.0
        %v590 = vmax.f32 %v568, 0.0
        %v591 = vmax.f32 %v570, 0.0
        %v592 = vmax.f32 %v573, 0.0
        %v593 = vmax.f32 %v575, 0.0
        %v594 = vmax.f32 %v578, 0.0
        %v595 = vmax.f32 %v580, 0.0
        %v596 = vpack.c.bf16 %v583, %v582
        %v597 = vpack.c.bf16 %v585, %v584
        %v598 = vpack.c.bf16 %v587, %v586
        %v599 = vpack.c.bf16 %v589, %v588
        %v600 = vpack.c.bf16 %v591, %v590
        %v601 = vpack.c.bf16 %v593, %v592
        %v602 = vpack.c.bf16 %v595, %v594
        %v603 = vld [vmem:[#allocation7] sm:$0xf]
        %v604 = vld [vmem:[#allocation7 + $0x4] sm:$0xf]
        %v605 = vld [vmem:[#allocation7 + $0x8] sm:$0xf]
        %v606 = vld [vmem:[#allocation7 + $0xc] sm:$0xf]
        %v607 = vld [vmem:[#allocation7 + $0x10] sm:$0xf]
        %v608 = vld [vmem:[#allocation7 + $0x14] sm:$0xf]
        %v609 = vld [vmem:[#allocation7 + $0x18] sm:$0xf]
        %v610 = vld [vmem:[#allocation7 + $0x1c] sm:$0xf]
        %v611 = vld [vmem:[#allocation7 + $0x20] sm:$0xf]
        %v612 = vld [vmem:[#allocation7 + $0x24] sm:$0xf]
        %v613 = vld [vmem:[#allocation7 + $0x28] sm:$0xf]
        %v614 = vld [vmem:[#allocation7 + $0x2c] sm:$0xf]
        %v615 = vld [vmem:[#allocation7 + $0x30] sm:$0xf]
        %v616 = vld [vmem:[#allocation7 + $0x34] sm:$0xf]
        %v617 = vld [vmem:[#allocation7 + $0x38] sm:$0xf]
        %v618 = vld [vmem:[#allocation7 + $0x3c] sm:$0xf]
        %v619 = vld [vmem:[%s4] sm:$0x1]
        %v621 = vperm.slane %v619, 0
        %v639 = vunpack.c.l.b16 %v603
        %v640 = vunpack.c.l.b16 %v604
        %v641 = vunpack.c.l.b16 %v605
        %v642 = vunpack.c.l.b16 %v606
        %v643 = vunpack.c.l.b16 %v607
        %v644 = vunpack.c.l.b16 %v608
        %v645 = vunpack.c.l.b16 %v609
        %v646 = vunpack.c.l.b16 %v610
        %v647 = vunpack.c.l.b16 %v611
        %v648 = vunpack.c.l.b16 %v612
        %v649 = vunpack.c.l.b16 %v613
        %v650 = vunpack.c.l.b16 %v614
        %v651 = vunpack.c.l.b16 %v615
        %v652 = vunpack.c.l.b16 %v616
        %v653 = vunpack.c.l.b16 %v617
        %v654 = vunpack.c.l.b16 %v618
        %v655 = vpack.c.b16 %v640, %v639
        %v656 = vpack.c.b16 %v642, %v641
        %v657 = vpack.c.b16 %v644, %v643
        %v658 = vpack.c.b16 %v646, %v645
        %v659 = vpack.c.b16 %v648, %v647
        %v660 = vpack.c.b16 %v650, %v649
        %v661 = vpack.c.b16 %v652, %v651
        %v662 = vpack.c.b16 %v654, %v653
        %671 = vmatpush.bf16.msra.mxu0 %v662
        %672 = vmatpush.bf16.msra.mxu0 %v661
        %673 = vmatpush.bf16.msra.mxu0 %v660
        %674 = vmatpush.bf16.msra.mxu0 %v659
        %675 = vmatpush.bf16.msra.mxu0 %v658
        %676 = vmatpush.bf16.msra.mxu0 %v657
        %677 = vmatpush.bf16.msra.mxu0 %v656
        %678 = vmatpush.bf16.msra.mxu0 %v655
        %679 = vmatmul.bf16.gmra.mxu0 %v596
        %v680 = vpop.f32.mrf.mxu0
        %v681 = vadd.f32 %v621, %v680
        %v682 = vpop.f32.mrf.mxu0
        %v683 = vadd.f32 %v621, %v682
        %684 = vmatmul.bf16.gmra.mxu0 %v597
        %v685 = vpop.f32.mrf.mxu0
        %v686 = vadd.f32 %v621, %v685
        %v687 = vpop.f32.mrf.mxu0
        %v688 = vadd.f32 %v621, %v687
        %689 = vmatmul.bf16.gmra.mxu0 %v598
        %v690 = vpop.f32.mrf.mxu0
        %v691 = vadd.f32 %v621, %v690
        %v692 = vpop.f32.mrf.mxu0
        %v693 = vadd.f32 %v621, %v692
        %694 = vmatmul.bf16.gmra.mxu0 %v599
        %v695 = vpop.f32.mrf.mxu0
        %v696 = vadd.f32 %v621, %v695
        %v697 = vpop.f32.mrf.mxu0
        %v698 = vadd.f32 %v621, %v697
        %699 = vmatmul.bf16.gmra.mxu0 %v600
        %v700 = vpop.f32.mrf.mxu0
        %v701 = vadd.f32 %v621, %v700
        %v702 = vpop.f32.mrf.mxu0
        %v703 = vadd.f32 %v621, %v702
        %704 = vmatmul.bf16.gmra.mxu0 %v601
        %v705 = vpop.f32.mrf.mxu0
        %v706 = vadd.f32 %v621, %v705
        %v707 = vpop.f32.mrf.mxu0
        %v708 = vadd.f32 %v621, %v707
        %709 = vmatmul.bf16.gmra.mxu0 %v602
        %v710 = vpop.f32.mrf.mxu0
        %v711 = vadd.f32 %v621, %v710
        %v712 = vpop.f32.mrf.mxu0
        %v713 = vadd.f32 %v621, %v712
        %714 = vdwg.mxu0
        %v715 = vmax.f32 %v681, 0.0
        %v716 = vmax.f32 %v683, 0.0
        %v717 = vmax.f32 %v686, 0.0
        %v718 = vmax.f32 %v688, 0.0
        %v719 = vmax.f32 %v691, 0.0
        %v720 = vmax.f32 %v693, 0.0
        %v721 = vmax.f32 %v696, 0.0
        %v722 = vmax.f32 %v698, 0.0
        %v723 = vmax.f32 %v701, 0.0
        %v724 = vmax.f32 %v703, 0.0
        %v725 = vmax.f32 %v706, 0.0
        %v726 = vmax.f32 %v708, 0.0
        %v727 = vmax.f32 %v711, 0.0
        %v728 = vmax.f32 %v713, 0.0
        %v729 = vpack.c.bf16 %v716, %v715
        %v730 = vpack.c.bf16 %v718, %v717
        %v731 = vpack.c.bf16 %v720, %v719
        %v732 = vpack.c.bf16 %v722, %v721
        %v733 = vpack.c.bf16 %v724, %v723
        %v734 = vpack.c.bf16 %v726, %v725
        %v735 = vpack.c.bf16 %v728, %v727
        %v736 = vld [vmem:[#allocation8] sm:$0xf]
        %v737 = vld [vmem:[#allocation8 + $0x4] sm:$0xf]
        %v738 = vld [vmem:[#allocation8 + $0x8] sm:$0xf]
        %v739 = vld [vmem:[#allocation8 + $0xc] sm:$0xf]
        %v740 = vld [vmem:[#allocation8 + $0x10] sm:$0xf]
        %v741 = vld [vmem:[#allocation8 + $0x14] sm:$0xf]
        %v742 = vld [vmem:[#allocation8 + $0x18] sm:$0xf]
        %v743 = vld [vmem:[#allocation8 + $0x1c] sm:$0xf]
        %v744 = vld [vmem:[#allocation8 + $0x20] sm:$0xf]
        %v745 = vld [vmem:[#allocation8 + $0x24] sm:$0xf]
        %v746 = vld [vmem:[#allocation8 + $0x28] sm:$0xf]
        %v747 = vld [vmem:[#allocation8 + $0x2c] sm:$0xf]
        %v748 = vld [vmem:[#allocation8 + $0x30] sm:$0xf]
        %v749 = vld [vmem:[#allocation8 + $0x34] sm:$0xf]
        %v750 = vld [vmem:[#allocation8 + $0x38] sm:$0xf]
        %v751 = vld [vmem:[#allocation8 + $0x3c] sm:$0xf]
        %v752 = vld [vmem:[%s6] sm:$0x1]
        %v754 = vperm.slane %v752, 0
        %v772 = vunpack.c.l.b16 %v736
        %v773 = vunpack.c.l.b16 %v737
        %v774 = vunpack.c.l.b16 %v738
        %v775 = vunpack.c.l.b16 %v739
        %v776 = vunpack.c.l.b16 %v740
        %v777 = vunpack.c.l.b16 %v741
        %v778 = vunpack.c.l.b16 %v742
        %v779 = vunpack.c.l.b16 %v743
        %v780 = vunpack.c.l.b16 %v744
        %v781 = vunpack.c.l.b16 %v745
        %v782 = vunpack.c.l.b16 %v746
        %v783 = vunpack.c.l.b16 %v747
        %v784 = vunpack.c.l.b16 %v748
        %v785 = vunpack.c.l.b16 %v749
        %v786 = vunpack.c.l.b16 %v750
        %v787 = vunpack.c.l.b16 %v751
        %v788 = vpack.c.b16 %v773, %v772
        %v789 = vpack.c.b16 %v775, %v774
        %v790 = vpack.c.b16 %v777, %v776
        %v791 = vpack.c.b16 %v779, %v778
        %v792 = vpack.c.b16 %v781, %v780
        %v793 = vpack.c.b16 %v783, %v782
        %v794 = vpack.c.b16 %v785, %v784
        %v795 = vpack.c.b16 %v787, %v786
        %804 = vmatpush.bf16.msra.mxu0 %v795
        %805 = vmatpush.bf16.msra.mxu0 %v794
        %806 = vmatpush.bf16.msra.mxu0 %v793
        %807 = vmatpush.bf16.msra.mxu0 %v792
        %808 = vmatpush.bf16.msra.mxu0 %v791
        %809 = vmatpush.bf16.msra.mxu0 %v790
        %810 = vmatpush.bf16.msra.mxu0 %v789
        %811 = vmatpush.bf16.msra.mxu0 %v788
        %812 = vmatmul.bf16.gmra.mxu0 %v729
        %v813 = vpop.f32.mrf.mxu0
        %v814 = vadd.f32 %v754, %v813
        %v815 = vpop.f32.mrf.mxu0
        %v816 = vadd.f32 %v754, %v815
        %817 = vmatmul.bf16.gmra.mxu0 %v730
        %v818 = vpop.f32.mrf.mxu0
        %v819 = vadd.f32 %v754, %v818
        %v820 = vpop.f32.mrf.mxu0
        %v821 = vadd.f32 %v754, %v820
        %822 = vmatmul.bf16.gmra.mxu0 %v731
        %v823 = vpop.f32.mrf.mxu0
        %v824 = vadd.f32 %v754, %v823
        %v825 = vpop.f32.mrf.mxu0
        %v826 = vadd.f32 %v754, %v825
        %827 = vmatmul.bf16.gmra.mxu0 %v732
        %v828 = vpop.f32.mrf.mxu0
        %v829 = vadd.f32 %v754, %v828
        %v830 = vpop.f32.mrf.mxu0
        %v831 = vadd.f32 %v754, %v830
        %832 = vmatmul.bf16.gmra.mxu0 %v733
        %v833 = vpop.f32.mrf.mxu0
        %v834 = vadd.f32 %v754, %v833
        %v835 = vpop.f32.mrf.mxu0
        %v836 = vadd.f32 %v754, %v835
        %837 = vmatmul.bf16.gmra.mxu0 %v734
        %v838 = vpop.f32.mrf.mxu0
        %v839 = vadd.f32 %v754, %v838
        %v840 = vpop.f32.mrf.mxu0
        %v841 = vadd.f32 %v754, %v840
        %842 = vmatmul.bf16.gmra.mxu0 %v735
        %v843 = vpop.f32.mrf.mxu0
        %v844 = vadd.f32 %v754, %v843
        %v845 = vpop.f32.mrf.mxu0
        %v846 = vadd.f32 %v754, %v845
        %847 = vdwg.mxu0
        %v848 = vpack.c.bf16 %v814, %v814
        %v849 = vpack.c.bf16 %v816, %v816
        %v850 = vpack.c.bf16 %v819, %v819
        %v851 = vpack.c.bf16 %v821, %v821
        %v852 = vpack.c.bf16 %v824, %v824
        %v853 = vpack.c.bf16 %v826, %v826
        %v854 = vpack.c.bf16 %v829, %v829
        %v855 = vpack.c.bf16 %v831, %v831
        %v856 = vpack.c.bf16 %v834, %v834
        %v857 = vpack.c.bf16 %v836, %v836
        %v858 = vpack.c.bf16 %v839, %v839
        %v859 = vpack.c.bf16 %v841, %v841
        %v860 = vpack.c.bf16 %v844, %v844
        %v861 = vpack.c.bf16 %v846, %v846
        %862 = vst [vmem:[%s348] sm:$0xf] %v848
        %863 = vst [vmem:[%s348 + $0x4] sm:$0xf] %v849
        %864 = vst [vmem:[%s348 + $0x8] sm:$0xf] %v850
        %865 = vst [vmem:[%s348 + $0xc] sm:$0xf] %v851
        %866 = vst [vmem:[%s348 + $0x10] sm:$0xf] %v852
        %867 = vst [vmem:[%s348 + $0x14] sm:$0xf] %v853
        %868 = vst [vmem:[%s348 + $0x18] sm:$0xf] %v854
        %869 = vst [vmem:[%s348 + $0x1c] sm:$0xf] %v855
        %870 = vst [vmem:[%s348 + $0x20] sm:$0xf] %v856
        %871 = vst [vmem:[%s348 + $0x24] sm:$0xf] %v857
        %872 = vst [vmem:[%s348 + $0x28] sm:$0xf] %v858
        %873 = vst [vmem:[%s348 + $0x2c] sm:$0xf] %v859
        %874 = vst [vmem:[%s348 + $0x30] sm:$0xf] %v860
        %875 = vst [vmem:[%s348 + $0x34] sm:$0xf] %v861
        %s876 = sand.u32 %s186, 1
        %s877 = scalar_lea.sflag [#allocation4], %s876
        %s878 = sand.u32 %s186, 1
        %s879 = smul.addr %s878, 56
        %s880 = scalar_lea.vmem [#allocation10], %s879
        // Predicated region
        $region65: #{tpu_custom_call.1} parent=47 // pred_check
          %p881 = pneg %p196
        $region66: #{tpu_custom_call.1} parent=47 // pred_check_branch
          %883 = sbr.rel (%p881) target = $region68
        $region67: #{tpu_custom_call.1} parent=47 // pred_region
          %s884 = smul.u32 14, %s26
          %886 = vsyncadd %s877, 0
          %s887 = smul.addr %s884, 4
          %s888 = scalar_lea.hbm %s7, %s887
          %s889 = sshll.u32 %s880, 4
          %s890 = int_to_ptr.vmem [resolvable:$true] %s889
          %s891 = sshll.u32 %s888, 4
          %s892 = int_to_ptr.hbm [resolvable:$true] %s891
          %897 = dma.vmem_to_hbm [thread:$0]  %s890, 896, %s892, %s877, 64, 64, 4
        $region68: #{tpu_custom_call.1} parent=47 // pred_fallthru
          _
      $region48: #{tpu_custom_call.1} parent=5 // pred_fallthru
        _
      %p898 = scmp.le.s32.totalorder 2, %s21
      // Predicated region
      $region69: #{tpu_custom_call.1} parent=5 // pred_check
        %p899 = pneg %p898
      $region70: #{tpu_custom_call.1} parent=5 // pred_check_branch
        %901 = sbr.rel (%p899) target = $region72
      $region71: #{tpu_custom_call.1} parent=5 // pred_region
        %s902 = ssub.s32 %s21, 2
        // Predicated region
        $region73: #{tpu_custom_call.1} parent=71 // pred_check
          %p903 = pneg %p202
        $region74: #{tpu_custom_call.1} parent=71 // pred_check_branch
          %905 = sbr.rel (%p903) target = $region76
        $region75: #{tpu_custom_call.1} parent=71 // pred_region
          %s906 = sand.u32 %s187, 1
          %s907 = scalar_lea.sflag [#allocation4], %s906
          %s908 = sand.u32 %s187, 1
          %s909 = smul.addr %s908, 56
          %s910 = scalar_lea.vmem [#allocation10], %s909
          %912 = dma.done %s907, 896
        $region76: #{tpu_custom_call.1} parent=71 // pred_fallthru
          _
      $region72: #{tpu_custom_call.1} parent=5 // pred_fallthru
        _
    $region6: #{tpu_custom_call.1} parent=1 // loop_footer
      %s25 = sadd.s32 1, %s21
    $region7: #{tpu_custom_call.1} parent=1 // loop_footer_branch
      %20 = sbr.rel target = $region3
    $region8: #{tpu_custom_call.1} parent=1 // loop_exit
      _
    %913 = vsyncpa [#allocation3], 1
    %s914 = scalar_lea.sflag [#allocation3], 1
    %915 = vsyncpa %s914, 1
    %916 = vsyncpa [#allocation6], 1
    %917 = vsyncpa [#allocation9], 1
    %918 = vsyncpa [#allocation4], 1
    %s919 = scalar_lea.sflag [#allocation4], 1
    %920 = vsyncpa %s919, 1

</llo_original>
